<compile_context>
chip_gen: v7x
topology: tpu7x:2x2x1
jax: 0.10.0
libtpu: 0.0.40
codegen_flags: <defaults>
</compile_context>

<pallas_src>
import numpy as np
import jax
import jax.numpy as jnp
from jax.experimental import pallas as pl
from jax.experimental.pallas import tpu as pltpu

_LANE = 128


def _round_up(x, m):
    return ((x + m - 1) // m) * m


def _vmem_capacity_bytes():
    """Physical VMEM per core; conservative fallback if the query is unavailable."""
    try:
        cap = int(pltpu.get_tpu_info().vmem_capacity_bytes)
        if cap > 0:
            return cap
    except Exception:
        pass
    return 64 << 20  # v7x per-TensorCore capacity (smallest of v5e/v6e/v7x)


def _choose_tb(batch, sublane, max_tb=256):
    """Batch-tile size: sublane multiple minimizing padded rows (<= max_tb)."""
    cands = []
    t = sublane
    while t <= max_tb:
        cands.append(t)
        t *= 2
    rb = _round_up(batch, sublane)
    if rb <= max_tb:
        cands.append(rb)
    best_tb, best_waste = None, None
    for tb in cands:
        waste = _round_up(batch, tb) - batch
        if (best_waste is None or waste < best_waste
                or (waste == best_waste and tb > best_tb)):
            best_tb, best_waste = tb, waste
    return best_tb


def _choose_fallback_tiles(s_pad, t_pad, tb, in_itemsize, budget):
    """(ts, tn): 128-multiple divisors of s_pad / t_pad for the S-reduction path."""
    m_t = t_pad // _LANE
    m_s = s_pad // _LANE
    t_divs = sorted([d for d in range(1, m_t + 1) if m_t % d == 0], reverse=True)
    s_divs = sorted([d for d in range(1, m_s + 1) if m_s % d == 0], reverse=True)
    for dt in t_divs:
        tn = dt * _LANE
        # double-buffered bias + f32 output tiles (accumulation lives in o_ref)
        fixed = 2 * tn * 4 + 2 * tb * tn * 4
        for ds in s_divs:
            ts = ds * _LANE
            ws = fixed + 2 * (tb * ts + ts * tn) * in_itemsize
            if ws <= budget:
                return ts, tn
    return _LANE, _LANE  # minimum tiles; rely on vmem_limit headroom


def _make_kernels(precision):
    def resident_kernel(x_ref, w_ref, b_ref, o_ref):
        # Whole (padded) reduction dim in one MXU call; weight stays VMEM-resident
        # across batch tiles (constant block index -> fetched from HBM once).
        o_ref[...] = (jnp.dot(x_ref[...], w_ref[...],
                              preferred_element_type=jnp.float32,
                              precision=precision)
                      + b_ref[...]).astype(o_ref.dtype)

    def tiled_kernel(x_ref, w_ref, b_ref, o_ref):
        # grid = (B tiles [parallel], T tiles [parallel], S tiles [reduction]).
        # o_ref is float32 and its block index is independent of k, so it stays
        # resident across the reduction -> accumulate into it directly, no scratch.
        k = pl.program_id(2)

        @pl.when(k == 0)
        def _():
            o_ref[...] = jnp.broadcast_to(b_ref[...], o_ref.shape).astype(o_ref.dtype)

        o_ref[...] += jnp.dot(x_ref[...], w_ref[...],
                              preferred_element_type=jnp.float32,
                              precision=precision)

    return resident_kernel, tiled_kernel


class OutputMappingPallas:
    """JAX/Pallas port of Output_Mapping (forward pass only)."""

    def __init__(self, source_class_num, target_class_num, mapping_method,
                 self_definded_map=None, num_source_to_map=None, seed=0,
                 compute_dtype=jnp.float32):
        self.source_class_num = source_class_num
        self.target_class_num = target_class_num
        self.mapping_method = mapping_method
        self.self_definded_map = self_definded_map
        self.num_source_to_map = num_source_to_map
        self.compute_dtype = jnp.dtype(compute_dtype)

        in_itemsize = self.compute_dtype.itemsize
        self.sublane = max(8, 32 // in_itemsize)          # 8 for f32, 16 for bf16
        self.dot_precision = (jax.lax.Precision.HIGHEST
                              if self.compute_dtype == jnp.dtype(jnp.float32)
                              else None)

        # Lane-dense, minimally padded geometry (independent of tile choices).
        self.t_pad = _round_up(target_class_num, _LANE)
        self.s_pad = _round_up(source_class_num, _LANE)

        # VMEM budget per generation (128 MiB v5e/v6e, 64 MiB v7x), passed
        # explicitly to Mosaic (default scoped limits are only 16/32 MiB).
        cap = _vmem_capacity_bytes()
        self.vmem_limit = max(16 << 20, min(cap * 3 // 4, 100 << 20))
        self.vmem_budget = self.vmem_limit * 3 // 4

        # Deterministic init of nn.Linear(source, target):
        # PyTorch default U(-1/sqrt(fan_in), 1/sqrt(fan_in)).
        k1, k2 = jax.random.split(jax.random.PRNGKey(seed))
        bound = 1.0 / np.sqrt(source_class_num)
        self.weight = jax.random.uniform(
            k1, (target_class_num, source_class_num),
            minval=-bound, maxval=bound, dtype=jnp.float32)
        self.bias = jax.random.uniform(
            k2, (target_class_num,),
            minval=-bound, maxval=bound, dtype=jnp.float32)

        # FC branch: transpose / cast / zero-pad the weight ONCE at init.
        wt = jnp.zeros((self.s_pad, self.t_pad), self.compute_dtype)
        wt = wt.at[:source_class_num, :target_class_num].set(
            self.weight.T.astype(self.compute_dtype))
        self.fc_weight_pad = wt
        fb = jnp.zeros((1, self.t_pad), jnp.float32)
        self.fc_bias_pad = fb.at[0, :target_class_num].set(self.bias)

        # Mapping branches: gather-mean == matmul with a selection/averaging matrix.
        if self_definded_map is not None:
            M = np.zeros((self.s_pad, self.t_pad), np.float32)
            for t, srcs in enumerate(self_definded_map):
                if len(srcs) == 0:
                    continue
                for s in srcs:
                    M[s, t] += 1.0 / float(len(srcs))
            self.map_matrix_pad = jnp.asarray(M, dtype=self.compute_dtype)
        else:
            self.map_matrix_pad = None
        self.zero_bias_pad = jnp.zeros((1, self.t_pad), jnp.float32)

        self._resident_kernel, self._tiled_kernel = _make_kernels(self.dot_precision)
        # One compile per input shape (cast + pad + pallas_call + slice under jit).
        self._jit_apply = jax.jit(self._apply_impl)

        # TODO(synk): Frequency_mapping / Semantic_mapping build self_definded_map
        # from a trained model + CLIP text encoder at setup time (not part of the
        # forward pass); here the map must be supplied directly.

    # ----------------------------------------------------------------------- #
    def _pallas_linear(self, x, w, b, tb):
        Bp, Sp = x.shape
        _, Tp = w.shape
        in_itemsize = self.compute_dtype.itemsize

        # --- Path 1: weight resident in VMEM (one HBM read of W per call) ----- #
        resident_bytes = (2 * Sp * Tp * in_itemsize     # W (count 2x pipeline bufs)
                          + 2 * tb * Sp * in_itemsize   # x tiles (double-buffered)
                          + 2 * tb * Tp * 4             # f32 output tiles
                          + 2 * Tp * 4)                 # bias
        if resident_bytes <= self.vmem_budget:
            # When the batch axis has a single tile, split T into two parallel
            # column blocks so a second TensorCore (v7x megacore) gets work.
            n_j = 2 if (Bp // tb == 1 and Tp % (2 * _LANE) == 0) else 1
            tn = Tp // n_j
            return pl.pallas_call(
                self._resident_kernel,
                out_shape=jax.ShapeDtypeStruct((Bp, Tp), jnp.float32),
                grid_spec=pltpu.PrefetchScalarGridSpec(
                    num_scalar_prefetch=0,
                    grid=(Bp // tb, n_j),
                    in_specs=[
                        pl.BlockSpec((tb, Sp), lambda i, j: (i, 0)),
                        pl.BlockSpec((Sp, tn), lambda i, j: (0, j)),
                        pl.BlockSpec((1, tn), lambda i, j: (0, j)),
                    ],
                    out_specs=pl.BlockSpec((tb, tn), lambda i, j: (i, j)),
                ),
                compiler_params=pltpu.CompilerParams(
                    dimension_semantics=("parallel", "parallel"),
                    vmem_limit_bytes=self.vmem_limit),
            )(x, w, b)

        # --- Path 2 (fallback, very large weights): tile T (parallel) + S (reduction)
        ts, tn = _choose_fallback_tiles(Sp, Tp, tb, in_itemsize, self.vmem_budget)
        return pl.pallas_call(
            self._tiled_kernel,
            out_shape=jax.ShapeDtypeStruct((Bp, Tp), jnp.float32),
            grid_spec=pltpu.PrefetchScalarGridSpec(
                num_scalar_prefetch=0,
                grid=(Bp // tb, Tp // tn, Sp // ts),
                in_specs=[
                    pl.BlockSpec((tb, ts), lambda i, j, k: (i, k)),
                    pl.BlockSpec((ts, tn), lambda i, j, k: (k, j)),
                    pl.BlockSpec((1, tn), lambda i, j, k: (0, j)),
                ],
                out_specs=pl.BlockSpec((tb, tn), lambda i, j, k: (i, j)),
            ),
            compiler_params=pltpu.CompilerParams(
                dimension_semantics=("parallel", "parallel", "arbitrary"),
                vmem_limit_bytes=self.vmem_limit),
        )(x, w, b)

    def _apply_impl(self, x, w_pad, b_pad):
        B, S = x.shape
        x = x.astype(self.compute_dtype)
        tb = _choose_tb(B, self.sublane)
        b_rows = _round_up(B, tb)
        pad_b, pad_s = b_rows - B, self.s_pad - S
        if pad_b or pad_s:
            x = jnp.pad(x, ((0, pad_b), (0, pad_s)))
        out = self._pallas_linear(x, w_pad, b_pad, tb)
        return out[:B, :self.target_class_num]

    def __call__(self, x):
        assert x.shape[-1] == self.source_class_num, (x.shape, self.source_class_num)
        if self.mapping_method in ('self_definded_mapping',
                                   'frequency_based_mapping',
                                   'semantic_mapping'):
            if self.map_matrix_pad is None:
                raise ValueError('Error: no mapping exist')
            return self._jit_apply(x, self.map_matrix_pad, self.zero_bias_pad)
        elif self.mapping_method == 'fully_connected_layer_mapping':
            return self._jit_apply(x, self.fc_weight_pad, self.fc_bias_pad)
        else:
            raise ValueError(f"unknown mapping_method: {self.mapping_method}")


if __name__ == "__main__":
    B, S, T, K = 8, 32, 8, 2

    key = jax.random.PRNGKey(0)
    x = jax.random.normal(key, (B, S), dtype=jnp.float32)

    # Deterministic self-defined map: target t <- sources [2t, 2t+1]
    self_map = [[2 * t, 2 * t + 1] for t in range(T)]

    # ---- mapping branch (gather-mean as selection matmul), resident path ----
    mod_map = OutputMappingPallas(S, T, 'self_definded_mapping',
                                  self_definded_map=self_map,
                                  num_source_to_map=K, seed=0)
    out_map = jax.block_until_ready(mod_map(x))
    ref_map = jnp.stack(
        [jnp.mean(x[:, jnp.array(self_map[t])], axis=1) for t in range(T)],
        axis=1)
    assert out_map.shape == (B, T)
    np.testing.assert_allclose(np.asarray(out_map), np.asarray(ref_map),
                               rtol=1e-5, atol=1e-5)

    # ---- fully connected branch (nn.Linear), resident path ----
    mod_fc = OutputMappingPallas(S, T, 'fully_connected_layer_mapping',
                                 self_definded_map=self_map,
                                 num_source_to_map=K, seed=0)
    out_fc = jax.block_until_ready(mod_fc(x))
    ref_fc = (np.asarray(x, np.float64) @ np.asarray(mod_fc.weight, np.float64).T
              + np.asarray(mod_fc.bias, np.float64))
    assert out_fc.shape == (B, T)
    np.testing.assert_allclose(np.asarray(out_fc), ref_fc, rtol=1e-4, atol=1e-4)

    # ---- forced T/S-tiled fallback path (multi-step reduction), f32 ----
    B2, S2, T2 = 16, 384, 130
    x2 = jax.random.normal(jax.random.PRNGKey(1), (B2, S2), dtype=jnp.float32)
    mod_big = OutputMappingPallas(S2, T2, 'fully_connected_layer_mapping', seed=1)
    mod_big.vmem_budget = 0        # force the tiled reduction path for coverage
    out_big = jax.block_until_ready(mod_big(x2))
    ref_big = (np.asarray(x2, np.float64) @ np.asarray(mod_big.weight, np.float64).T
               + np.asarray(mod_big.bias, np.float64))
    assert out_big.shape == (B2, T2)
    np.testing.assert_allclose(np.asarray(out_big), ref_big, rtol=1e-4, atol=1e-4)

    # ---- bfloat16 compute (halves the weight HBM stream), resident path ----
    mod_bf16 = OutputMappingPallas(S2, T2, 'fully_connected_layer_mapping', seed=1,
                                   compute_dtype=jnp.bfloat16)
    out_bf16 = jax.block_until_ready(mod_bf16(x2))
    assert out_bf16.shape == (B2, T2)
    np.testing.assert_allclose(np.asarray(out_bf16), ref_big, rtol=3e-2, atol=3e-2)

    print("KERNEL_OK")
</pallas_src>

<mosaic_0001>
module attributes {stable_mosaic.version = 11 : i64} {
  func.func @resident_kernel(%arg0: i32, %arg1: i32, %arg2: memref<8x128xf32, #tpu.memory_space<vmem>>, %arg3: memref<128x128xf32, #tpu.memory_space<vmem>>, %arg4: memref<1x128xf32, #tpu.memory_space<vmem>>, %arg5: memref<8x128xf32, #tpu.memory_space<vmem>>) attributes {dimension_semantics = [#tpu.dimension_semantics<parallel>, #tpu.dimension_semantics<parallel>], iteration_bounds = array<i64: 1, 1>, scalar_prefetch = 0 : i64, scratch_operands = 0 : i64, tpu.core_type = #tpu.core_type<tc>, window_params = [{transform_indices = @transform_0, window_bounds = array<i64: 8, 128>}, {transform_indices = @transform_1, window_bounds = array<i64: 128, 128>}, {transform_indices = @transform_2, window_bounds = array<i64: 1, 128>}, {transform_indices = @transform_3, window_bounds = array<i64: 8, 128>}]} {
    %c0 = arith.constant 0 : index
    %c0_0 = arith.constant 0 : index
    %0 = vector.load %arg2[%c0, %c0_0] : memref<8x128xf32, #tpu.memory_space<vmem>>, vector<8x128xf32>
    %c0_1 = arith.constant 0 : index
    %c0_2 = arith.constant 0 : index
    %1 = vector.load %arg3[%c0_1, %c0_2] : memref<128x128xf32, #tpu.memory_space<vmem>>, vector<128x128xf32>
    %cst = arith.constant dense<0.000000e+00> : vector<8x128xf32>
    %2 = tpu.matmul %0, %1, %cst {dimension_numbers = #tpu.dot_dimension_numbers<[1], [0], [0], [1], [0, 0, 1, 1], [], []>, precision = #tpu.contract_precision<fp32>} : vector<8x128xf32>, vector<128x128xf32>, vector<8x128xf32> -> vector<8x128xf32>
    %c0_3 = arith.constant 0 : index
    %c0_4 = arith.constant 0 : index
    %3 = vector.load %arg4[%c0_3, %c0_4] : memref<1x128xf32, #tpu.memory_space<vmem>>, vector<1x128xf32>
    %4 = vector.broadcast %3 : vector<1x128xf32> to vector<8x128xf32>
    %5 = arith.addf %2, %4 : vector<8x128xf32>
    %c0_5 = arith.constant 0 : index
    %c0_6 = arith.constant 0 : index
    %6 = vector.load %arg5[%c0_5, %c0_6] : memref<8x128xf32, #tpu.memory_space<vmem>>, vector<8x128xf32>
    tpu.vector_store %arg5[%c0_5, %c0_6], %5 {strides = array<i32>} : memref<8x128xf32, #tpu.memory_space<vmem>>, vector<8x128xf32>,
    return
  }
  func.func @transform_0(%arg0: i32, %arg1: i32) -> (i32, i32) {
    %c0_i32 = arith.constant 0 : i32
    %c0_i32_0 = arith.constant 0 : i32
    return %arg0, %c0_i32 : i32, i32
  }
  func.func @transform_1(%arg0: i32, %arg1: i32) -> (i32, i32) {
    %c0_i32 = arith.constant 0 : i32
    %c0_i32_0 = arith.constant 0 : i32
    return %c0_i32, %arg1 : i32, i32
  }
  func.func @transform_2(%arg0: i32, %arg1: i32) -> (i32, i32) {
    %c0_i32 = arith.constant 0 : i32
    %c0_i32_0 = arith.constant 0 : i32
    return %c0_i32, %arg1 : i32, i32
  }
  func.func @transform_3(%arg0: i32, %arg1: i32) -> (i32, i32) {
    %c0_i32 = arith.constant 0 : i32
    return %arg0, %arg1 : i32, i32
  }
}

</mosaic_0001>

<llo_original>
// kernel: _apply_impl.1
$region0: #{_apply_impl.1}
  #allocation0 [shape = 'u32[]', space=smem, size = 0x4, offset = 0x4, fixed_abs, tag = 'smem constant byte address 0x4 - core index']
  #allocation1 [shape = 'u32[144,128]{1,0:T(1,128)}', space=vmem, size = 0x12000, scoped, tag = 'internal scratch']
  %s0 = inlined_call_operand.vmem [shape: f32[8,128], index: 0, kind: input, shape index: {}]
  %s1 = inlined_call_operand.hbm [shape: f32[128,128], index: 1, kind: input, shape index: {}]
  %s2 = inlined_call_operand.vmem [shape: f32[1,128], index: 2, kind: input, shape index: {}]
  %s3 = inlined_call_operand.hbm [shape: f32[8,128], index: 3, kind: output, shape index: {}]
  %s4 = sld [smem:[#allocation0]]
  $region26: #{_apply_impl.1} parent=0
    _
  %s6 = ssub.s32 1, %s4
  %s7 = scalar_select 0, %s6, %s4
  $region1: #{_apply_impl.1} parent=0
    #allocation2 [shape = 'u8[65536]{0}', space=vmem, size = 0x10000, scoped, tag = 'input window, operand 1, single buffered']
    #allocation3 [shape = 's32[1]{0}', space=sflag, size = 0x4, scoped, tag = 'scoped memory for _apply_impl.1']
    #allocation4 [shape = 's32[1]{0}', space=sflag, size = 0x4, scoped, tag = 'scoped memory for _apply_impl.1']
    #allocation5 [shape = 'u8[4096]{0}', space=vmem, size = 0x1000, scoped, tag = 'output window, operand 0, single buffered']
    %8 = vsyncpa [#allocation3], 0
    %9 = vsyncpa [#allocation4], 0
    // Predicated region
    $region2: #{_apply_impl.1} parent=1 // pred_check
      _
    $region3: #{_apply_impl.1} parent=1 // pred_check_branch
      %11 = sbr.rel (0) target = $region5
    $region4: #{_apply_impl.1} parent=1 // pred_region
      _
    $region5: #{_apply_impl.1} parent=1 // pred_fallthru
      _
    // Predicated region
    $region6: #{_apply_impl.1} parent=1 // pred_check
      _
    $region7: #{_apply_impl.1} parent=1 // pred_check_branch
      %13 = sbr.rel (0) target = $region9
    $region8: #{_apply_impl.1} parent=1 // pred_region
      %s15 = ssub.s32 2048, 2048
      %16 = vsyncadd [#allocation3], %s15
      %s17 = sshll.u32 [#allocation2], 4
      %s18 = int_to_ptr.vmem [resolvable:$true] %s17
      %23 = dma.hbm_to_vmem [thread:$0]  %s1, 2048, %s18, [#allocation3], 128, 128, 8
    $region9: #{_apply_impl.1} parent=1 // pred_fallthru
      _
    // Predicated region
    $region10: #{_apply_impl.1} parent=1 // pred_check
      _
    $region11: #{_apply_impl.1} parent=1 // pred_check_branch
      %25 = sbr.rel (0) target = $region13
    $region12: #{_apply_impl.1} parent=1 // pred_region
      _
    $region13: #{_apply_impl.1} parent=1 // pred_fallthru
      _
    // Predicated region
    $region14: #{_apply_impl.1} parent=1 // pred_check
      _
    $region15: #{_apply_impl.1} parent=1 // pred_check_branch
      %27 = sbr.rel (0) target = $region17
    $region16: #{_apply_impl.1} parent=1 // pred_region
      %28 = dma.done [#allocation3], 2048
    $region17: #{_apply_impl.1} parent=1 // pred_fallthru
      _
    %v29 = vld [vmem:[%s0] sm:$0xff]
    %v30 = vld [vmem:[#allocation2] sm:$0xff]
    %v31 = vld [vmem:[#allocation2 + $0x8] sm:$0xff]
    %v32 = vld [vmem:[#allocation2 + $0x10] sm:$0xff]
    %v33 = vld [vmem:[#allocation2 + $0x18] sm:$0xff]
    %v34 = vld [vmem:[#allocation2 + $0x20] sm:$0xff]
    %v35 = vld [vmem:[#allocation2 + $0x28] sm:$0xff]
    %v36 = vld [vmem:[#allocation2 + $0x30] sm:$0xff]
    %v37 = vld [vmem:[#allocation2 + $0x38] sm:$0xff]
    %v38 = vld [vmem:[#allocation2 + $0x40] sm:$0xff]
    %v39 = vld [vmem:[#allocation2 + $0x48] sm:$0xff]
    %v40 = vld [vmem:[#allocation2 + $0x50] sm:$0xff]
    %v41 = vld [vmem:[#allocation2 + $0x58] sm:$0xff]
    %v42 = vld [vmem:[#allocation2 + $0x60] sm:$0xff]
    %v43 = vld [vmem:[#allocation2 + $0x68] sm:$0xff]
    %v44 = vld [vmem:[#allocation2 + $0x70] sm:$0xff]
    %v45 = vld [vmem:[#allocation2 + $0x78] sm:$0xff]
    %v46 = vld [vmem:[%s2] sm:$0x1]
    %v48 = vlaneseq
    %v49 = vshrl.u32 %v48, 7
    %v50 = vsub.s32 0, %v49
    %v51 = vrot.slane %v46, %v50
    %53 = vmatprep.subr.mxu0 0.0
    %v54 = vand.u32 %v30, 4294901760
    %55 = vmatpush1.msra.mxu0 %v54
    %56 = vmatprep.subr.mxu0 0.0
    %v57 = vand.u32 %v31, 4294901760
    %58 = vmatpush1.msra.mxu0 %v57
    %59 = vmatprep.subr.mxu0 0.0
    %v60 = vand.u32 %v32, 4294901760
    %61 = vmatpush1.msra.mxu0 %v60
    %62 = vmatprep.subr.mxu0 0.0
    %v63 = vand.u32 %v33, 4294901760
    %64 = vmatpush1.msra.mxu0 %v63
    %65 = vmatprep.subr.mxu0 0.0
    %v66 = vand.u32 %v34, 4294901760
    %67 = vmatpush1.msra.mxu0 %v66
    %68 = vmatprep.subr.mxu0 0.0
    %v69 = vand.u32 %v35, 4294901760
    %70 = vmatpush1.msra.mxu0 %v69
    %71 = vmatprep.subr.mxu0 0.0
    %v72 = vand.u32 %v36, 4294901760
    %73 = vmatpush1.msra.mxu0 %v72
    %74 = vmatprep.subr.mxu0 0.0
    %v75 = vand.u32 %v37, 4294901760
    %76 = vmatpush1.msra.mxu0 %v75
    %77 = vmatprep.subr.mxu0 0.0
    %v78 = vand.u32 %v38, 4294901760
    %79 = vmatpush1.msra.mxu0 %v78
    %80 = vmatprep.subr.mxu0 0.0
    %v81 = vand.u32 %v39, 4294901760
    %82 = vmatpush1.msra.mxu0 %v81
    %83 = vmatprep.subr.mxu0 0.0
    %v84 = vand.u32 %v40, 4294901760
    %85 = vmatpush1.msra.mxu0 %v84
    %86 = vmatprep.subr.mxu0 0.0
    %v87 = vand.u32 %v41, 4294901760
    %88 = vmatpush1.msra.mxu0 %v87
    %89 = vmatprep.subr.mxu0 0.0
    %v90 = vand.u32 %v42, 4294901760
    %91 = vmatpush1.msra.mxu0 %v90
    %92 = vmatprep.subr.mxu0 0.0
    %v93 = vand.u32 %v43, 4294901760
    %94 = vmatpush1.msra.mxu0 %v93
    %95 = vmatprep.subr.mxu0 0.0
    %v96 = vand.u32 %v44, 4294901760
    %97 = vmatpush1.msra.mxu0 %v96
    %98 = vmatprep.subr.mxu0 0.0
    %v99 = vand.u32 %v45, 4294901760
    %100 = vmatpush1.msra.mxu0 %v99
    %101 = vmatprep.subr.mxu0 0.0
    %102 = vmatpush1.msra.mxu0 0.0
    %103 = vmatprep.subr.mxu0 0.0
    %104 = vmatpush1.msra.mxu0 0.0
    %105 = vmatprep.subr.mxu0 0.0
    %106 = vmatpush1.msra.mxu0 0.0
    %107 = vmatprep.subr.mxu0 0.0
    %108 = vmatpush1.msra.mxu0 0.0
    %109 = vmatprep.subr.mxu0 0.0
    %110 = vmatpush1.msra.mxu0 0.0
    %111 = vmatprep.subr.mxu0 0.0
    %112 = vmatpush1.msra.mxu0 0.0
    %113 = vmatprep.subr.mxu0 0.0
    %114 = vmatpush1.msra.mxu0 0.0
    %115 = vmatprep.subr.mxu0 0.0
    %116 = vmatpush1.msra.mxu0 0.0
    %117 = vmatprep.subr.mxu0 0.0
    %118 = vmatpush1.msra.mxu0 0.0
    %119 = vmatprep.subr.mxu0 0.0
    %120 = vmatpush1.msra.mxu0 0.0
    %121 = vmatprep.subr.mxu0 0.0
    %122 = vmatpush1.msra.mxu0 0.0
    %123 = vmatprep.subr.mxu0 0.0
    %124 = vmatpush1.msra.mxu0 0.0
    %125 = vmatprep.subr.mxu0 0.0
    %126 = vmatpush1.msra.mxu0 0.0
    %127 = vmatprep.subr.mxu0 0.0
    %128 = vmatpush1.msra.mxu0 0.0
    %129 = vmatprep.subr.mxu0 0.0
    %130 = vmatpush1.msra.mxu0 0.0
    %131 = vmatprep.subr.mxu0 0.0
    %132 = vmatpush1.msra.mxu0 0.0
    %133 = vmatprep.mubr.f32.mxu0 0.0
    %v134 = vand.u32 %v29, 4294901760
    %v135 = vsub.f32 %v29, %v134
    %v136 = vand.u32 %v135, 4294901760
    %v137 = vsub.f32 %v135, %v136
    %v138 = vand.u32 %v137, 4294901760
    %139 = vmatmul.mubr.f32.gmra.mrb[0].mxu0 %v138
    %v140 = vpop.f32.mrb[0].mxu0
    %v141 = vadd.f32 %v51, %v140
    %v142 = vpop.f32.mrb[0].mxu0
    %143 = vdwg.mxu0
    %144 = vmatprep.subr.mxu0 0.0
    %v145 = vand.u32 %v30, 4294901760
    %v146 = vsub.f32 %v30, %v145
    %v147 = vand.u32 %v146, 4294901760
    %v148 = vsub.f32 %v146, %v147
    %v149 = vand.u32 %v148, 4294901760
    %150 = vmatpush1.msra.mxu0 %v149
    %151 = vmatprep.subr.mxu0 0.0
    %v152 = vand.u32 %v31, 4294901760
    %v153 = vsub.f32 %v31, %v152
    %v154 = vand.u32 %v153, 4294901760
    %v155 = vsub.f32 %v153, %v154
    %v156 = vand.u32 %v155, 4294901760
    %157 = vmatpush1.msra.mxu0 %v156
    %158 = vmatprep.subr.mxu0 0.0
    %v159 = vand.u32 %v32, 4294901760
    %v160 = vsub.f32 %v32, %v159
    %v161 = vand.u32 %v160, 4294901760
    %v162 = vsub.f32 %v160, %v161
    %v163 = vand.u32 %v162, 4294901760
    %164 = vmatpush1.msra.mxu0 %v163
    %165 = vmatprep.subr.mxu0 0.0
    %v166 = vand.u32 %v33, 4294901760
    %v167 = vsub.f32 %v33, %v166
    %v168 = vand.u32 %v167, 4294901760
    %v169 = vsub.f32 %v167, %v168
    %v170 = vand.u32 %v169, 4294901760
    %171 = vmatpush1.msra.mxu0 %v170
    %172 = vmatprep.subr.mxu0 0.0
    %v173 = vand.u32 %v34, 4294901760
    %v174 = vsub.f32 %v34, %v173
    %v175 = vand.u32 %v174, 4294901760
    %v176 = vsub.f32 %v174, %v175
    %v177 = vand.u32 %v176, 4294901760
    %178 = vmatpush1.msra.mxu0 %v177
    %179 = vmatprep.subr.mxu0 0.0
    %v180 = vand.u32 %v35, 4294901760
    %v181 = vsub.f32 %v35, %v180
    %v182 = vand.u32 %v181, 4294901760
    %v183 = vsub.f32 %v181, %v182
    %v184 = vand.u32 %v183, 4294901760
    %185 = vmatpush1.msra.mxu0 %v184
    %186 = vmatprep.subr.mxu0 0.0
    %v187 = vand.u32 %v36, 4294901760
    %v188 = vsub.f32 %v36, %v187
    %v189 = vand.u32 %v188, 4294901760
    %v190 = vsub.f32 %v188, %v189
    %v191 = vand.u32 %v190, 4294901760
    %192 = vmatpush1.msra.mxu0 %v191
    %193 = vmatprep.subr.mxu0 0.0
    %v194 = vand.u32 %v37, 4294901760
    %v195 = vsub.f32 %v37, %v194
    %v196 = vand.u32 %v195, 4294901760
    %v197 = vsub.f32 %v195, %v196
    %v198 = vand.u32 %v197, 4294901760
    %199 = vmatpush1.msra.mxu0 %v198
    %200 = vmatprep.subr.mxu0 0.0
    %v201 = vand.u32 %v38, 4294901760
    %v202 = vsub.f32 %v38, %v201
    %v203 = vand.u32 %v202, 4294901760
    %v204 = vsub.f32 %v202, %v203
    %v205 = vand.u32 %v204, 4294901760
    %206 = vmatpush1.msra.mxu0 %v205
    %207 = vmatprep.subr.mxu0 0.0
    %v208 = vand.u32 %v39, 4294901760
    %v209 = vsub.f32 %v39, %v208
    %v210 = vand.u32 %v209, 4294901760
    %v211 = vsub.f32 %v209, %v210
    %v212 = vand.u32 %v211, 4294901760
    %213 = vmatpush1.msra.mxu0 %v212
    %214 = vmatprep.subr.mxu0 0.0
    %v215 = vand.u32 %v40, 4294901760
    %v216 = vsub.f32 %v40, %v215
    %v217 = vand.u32 %v216, 4294901760
    %v218 = vsub.f32 %v216, %v217
    %v219 = vand.u32 %v218, 4294901760
    %220 = vmatpush1.msra.mxu0 %v219
    %221 = vmatprep.subr.mxu0 0.0
    %v222 = vand.u32 %v41, 4294901760
    %v223 = vsub.f32 %v41, %v222
    %v224 = vand.u32 %v223, 4294901760
    %v225 = vsub.f32 %v223, %v224
    %v226 = vand.u32 %v225, 4294901760
    %227 = vmatpush1.msra.mxu0 %v226
    %228 = vmatprep.subr.mxu0 0.0
    %v229 = vand.u32 %v42, 4294901760
    %v230 = vsub.f32 %v42, %v229
    %v231 = vand.u32 %v230, 4294901760
    %v232 = vsub.f32 %v230, %v231
    %v233 = vand.u32 %v232, 4294901760
    %234 = vmatpush1.msra.mxu0 %v233
    %235 = vmatprep.subr.mxu0 0.0
    %v236 = vand.u32 %v43, 4294901760
    %v237 = vsub.f32 %v43, %v236
    %v238 = vand.u32 %v237, 4294901760
    %v239 = vsub.f32 %v237, %v238
    %v240 = vand.u32 %v239, 4294901760
    %241 = vmatpush1.msra.mxu0 %v240
    %242 = vmatprep.subr.mxu0 0.0
    %v243 = vand.u32 %v44, 4294901760
    %v244 = vsub.f32 %v44, %v243
    %v245 = vand.u32 %v244, 4294901760
    %v246 = vsub.f32 %v244, %v245
    %v247 = vand.u32 %v246, 4294901760
    %248 = vmatpush1.msra.mxu0 %v247
    %249 = vmatprep.subr.mxu0 0.0
    %v250 = vand.u32 %v45, 4294901760
    %v251 = vsub.f32 %v45, %v250
    %v252 = vand.u32 %v251, 4294901760
    %v253 = vsub.f32 %v251, %v252
    %v254 = vand.u32 %v253, 4294901760
    %255 = vmatpush1.msra.mxu0 %v254
    %256 = vmatprep.subr.mxu0 0.0
    %257 = vmatpush1.msra.mxu0 0.0
    %258 = vmatprep.subr.mxu0 0.0
    %259 = vmatpush1.msra.mxu0 0.0
    %260 = vmatprep.subr.mxu0 0.0
    %261 = vmatpush1.msra.mxu0 0.0
    %262 = vmatprep.subr.mxu0 0.0
    %263 = vmatpush1.msra.mxu0 0.0
    %264 = vmatprep.subr.mxu0 0.0
    %265 = vmatpush1.msra.mxu0 0.0
    %266 = vmatprep.subr.mxu0 0.0
    %267 = vmatpush1.msra.mxu0 0.0
    %268 = vmatprep.subr.mxu0 0.0
    %269 = vmatpush1.msra.mxu0 0.0
    %270 = vmatprep.subr.mxu0 0.0
    %271 = vmatpush1.msra.mxu0 0.0
    %272 = vmatprep.subr.mxu0 0.0
    %273 = vmatpush1.msra.mxu0 0.0
    %274 = vmatprep.subr.mxu0 0.0
    %275 = vmatpush1.msra.mxu0 0.0
    %276 = vmatprep.subr.mxu0 0.0
    %277 = vmatpush1.msra.mxu0 0.0
    %278 = vmatprep.subr.mxu0 0.0
    %279 = vmatpush1.msra.mxu0 0.0
    %280 = vmatprep.subr.mxu0 0.0
    %281 = vmatpush1.msra.mxu0 0.0
    %282 = vmatprep.subr.mxu0 0.0
    %283 = vmatpush1.msra.mxu0 0.0
    %284 = vmatprep.subr.mxu0 0.0
    %285 = vmatpush1.msra.mxu0 0.0
    %286 = vmatprep.subr.mxu0 0.0
    %287 = vmatpush1.msra.mxu0 0.0
    %288 = vmatprep.mubr.f32.mxu0 0.0
    %v289 = vand.u32 %v29, 4294901760
    %290 = vmatmul.mubr.f32.gmra.mrb[0].mxu0 %v289
    %v291 = vpop.f32.mrb[0].mxu0
    %v292 = vadd.f32 %v141, %v291
    %v293 = vpop.f32.mrb[0].mxu0
    %294 = vdwg.mxu0
    %295 = vmatprep.subr.mxu0 0.0
    %v296 = vand.u32 %v30, 4294901760
    %v297 = vsub.f32 %v30, %v296
    %298 = vmatpush1.msra.mxu0 %v297
    %299 = vmatprep.subr.mxu0 0.0
    %v300 = vand.u32 %v31, 4294901760
    %v301 = vsub.f32 %v31, %v300
    %302 = vmatpush1.msra.mxu0 %v301
    %303 = vmatprep.subr.mxu0 0.0
    %v304 = vand.u32 %v32, 4294901760
    %v305 = vsub.f32 %v32, %v304
    %306 = vmatpush1.msra.mxu0 %v305
    %307 = vmatprep.subr.mxu0 0.0
    %v308 = vand.u32 %v33, 4294901760
    %v309 = vsub.f32 %v33, %v308
    %310 = vmatpush1.msra.mxu0 %v309
    %311 = vmatprep.subr.mxu0 0.0
    %v312 = vand.u32 %v34, 4294901760
    %v313 = vsub.f32 %v34, %v312
    %314 = vmatpush1.msra.mxu0 %v313
    %315 = vmatprep.subr.mxu0 0.0
    %v316 = vand.u32 %v35, 4294901760
    %v317 = vsub.f32 %v35, %v316
    %318 = vmatpush1.msra.mxu0 %v317
    %319 = vmatprep.subr.mxu0 0.0
    %v320 = vand.u32 %v36, 4294901760
    %v321 = vsub.f32 %v36, %v320
    %322 = vmatpush1.msra.mxu0 %v321
    %323 = vmatprep.subr.mxu0 0.0
    %v324 = vand.u32 %v37, 4294901760
    %v325 = vsub.f32 %v37, %v324
    %326 = vmatpush1.msra.mxu0 %v325
    %327 = vmatprep.subr.mxu0 0.0
    %v328 = vand.u32 %v38, 4294901760
    %v329 = vsub.f32 %v38, %v328
    %330 = vmatpush1.msra.mxu0 %v329
    %331 = vmatprep.subr.mxu0 0.0
    %v332 = vand.u32 %v39, 4294901760
    %v333 = vsub.f32 %v39, %v332
    %334 = vmatpush1.msra.mxu0 %v333
    %335 = vmatprep.subr.mxu0 0.0
    %v336 = vand.u32 %v40, 4294901760
    %v337 = vsub.f32 %v40, %v336
    %338 = vmatpush1.msra.mxu0 %v337
    %339 = vmatprep.subr.mxu0 0.0
    %v340 = vand.u32 %v41, 4294901760
    %v341 = vsub.f32 %v41, %v340
    %342 = vmatpush1.msra.mxu0 %v341
    %343 = vmatprep.subr.mxu0 0.0
    %v344 = vand.u32 %v42, 4294901760
    %v345 = vsub.f32 %v42, %v344
    %346 = vmatpush1.msra.mxu0 %v345
    %347 = vmatprep.subr.mxu0 0.0
    %v348 = vand.u32 %v43, 4294901760
    %v349 = vsub.f32 %v43, %v348
    %350 = vmatpush1.msra.mxu0 %v349
    %351 = vmatprep.subr.mxu0 0.0
    %v352 = vand.u32 %v44, 4294901760
    %v353 = vsub.f32 %v44, %v352
    %354 = vmatpush1.msra.mxu0 %v353
    %355 = vmatprep.subr.mxu0 0.0
    %v356 = vand.u32 %v45, 4294901760
    %v357 = vsub.f32 %v45, %v356
    %358 = vmatpush1.msra.mxu0 %v357
    %359 = vmatprep.subr.mxu0 0.0
    %360 = vmatpush1.msra.mxu0 0.0
    %361 = vmatprep.subr.mxu0 0.0
    %362 = vmatpush1.msra.mxu0 0.0
    %363 = vmatprep.subr.mxu0 0.0
    %364 = vmatpush1.msra.mxu0 0.0
    %365 = vmatprep.subr.mxu0 0.0
    %366 = vmatpush1.msra.mxu0 0.0
    %367 = vmatprep.subr.mxu0 0.0
    %368 = vmatpush1.msra.mxu0 0.0
    %369 = vmatprep.subr.mxu0 0.0
    %370 = vmatpush1.msra.mxu0 0.0
    %371 = vmatprep.subr.mxu0 0.0
    %372 = vmatpush1.msra.mxu0 0.0
    %373 = vmatprep.subr.mxu0 0.0
    %374 = vmatpush1.msra.mxu0 0.0
    %375 = vmatprep.subr.mxu0 0.0
    %376 = vmatpush1.msra.mxu0 0.0
    %377 = vmatprep.subr.mxu0 0.0
    %378 = vmatpush1.msra.mxu0 0.0
    %379 = vmatprep.subr.mxu0 0.0
    %380 = vmatpush1.msra.mxu0 0.0
    %381 = vmatprep.subr.mxu0 0.0
    %382 = vmatpush1.msra.mxu0 0.0
    %383 = vmatprep.subr.mxu0 0.0
    %384 = vmatpush1.msra.mxu0 0.0
    %385 = vmatprep.subr.mxu0 0.0
    %386 = vmatpush1.msra.mxu0 0.0
    %387 = vmatprep.subr.mxu0 0.0
    %388 = vmatpush1.msra.mxu0 0.0
    %389 = vmatprep.subr.mxu0 0.0
    %390 = vmatpush1.msra.mxu0 0.0
    %391 = vmatprep.mubr.f32.mxu0 0.0
    %v392 = vand.u32 %v29, 4294901760
    %v393 = vsub.f32 %v29, %v392
    %394 = vmatmul.mubr.f32.gmra.mrb[0].mxu0 %v393
    %v395 = vpop.f32.mrb[0].mxu0
    %v396 = vadd.f32 %v292, %v395
    %v397 = vpop.f32.mrb[0].mxu0
    %398 = vdwg.mxu0
    %399 = vmatprep.subr.mxu0 0.0
    %v400 = vand.u32 %v30, 4294901760
    %401 = vmatpush1.msra.mxu0 %v400
    %402 = vmatprep.subr.mxu0 0.0
    %v403 = vand.u32 %v31, 4294901760
    %404 = vmatpush1.msra.mxu0 %v403
    %405 = vmatprep.subr.mxu0 0.0
    %v406 = vand.u32 %v32, 4294901760
    %407 = vmatpush1.msra.mxu0 %v406
    %408 = vmatprep.subr.mxu0 0.0
    %v409 = vand.u32 %v33, 4294901760
    %410 = vmatpush1.msra.mxu0 %v409
    %411 = vmatprep.subr.mxu0 0.0
    %v412 = vand.u32 %v34, 4294901760
    %413 = vmatpush1.msra.mxu0 %v412
    %414 = vmatprep.subr.mxu0 0.0
    %v415 = vand.u32 %v35, 4294901760
    %416 = vmatpush1.msra.mxu0 %v415
    %417 = vmatprep.subr.mxu0 0.0
    %v418 = vand.u32 %v36, 4294901760
    %419 = vmatpush1.msra.mxu0 %v418
    %420 = vmatprep.subr.mxu0 0.0
    %v421 = vand.u32 %v37, 4294901760
    %422 = vmatpush1.msra.mxu0 %v421
    %423 = vmatprep.subr.mxu0 0.0
    %v424 = vand.u32 %v38, 4294901760
    %425 = vmatpush1.msra.mxu0 %v424
    %426 = vmatprep.subr.mxu0 0.0
    %v427 = vand.u32 %v39, 4294901760
    %428 = vmatpush1.msra.mxu0 %v427
    %429 = vmatprep.subr.mxu0 0.0
    %v430 = vand.u32 %v40, 4294901760
    %431 = vmatpush1.msra.mxu0 %v430
    %432 = vmatprep.subr.mxu0 0.0
    %v433 = vand.u32 %v41, 4294901760
    %434 = vmatpush1.msra.mxu0 %v433
    %435 = vmatprep.subr.mxu0 0.0
    %v436 = vand.u32 %v42, 4294901760
    %437 = vmatpush1.msra.mxu0 %v436
    %438 = vmatprep.subr.mxu0 0.0
    %v439 = vand.u32 %v43, 4294901760
    %440 = vmatpush1.msra.mxu0 %v439
    %441 = vmatprep.subr.mxu0 0.0
    %v442 = vand.u32 %v44, 4294901760
    %443 = vmatpush1.msra.mxu0 %v442
    %444 = vmatprep.subr.mxu0 0.0
    %v445 = vand.u32 %v45, 4294901760
    %446 = vmatpush1.msra.mxu0 %v445
    %447 = vmatprep.subr.mxu0 0.0
    %448 = vmatpush1.msra.mxu0 0.0
    %449 = vmatprep.subr.mxu0 0.0
    %450 = vmatpush1.msra.mxu0 0.0
    %451 = vmatprep.subr.mxu0 0.0
    %452 = vmatpush1.msra.mxu0 0.0
    %453 = vmatprep.subr.mxu0 0.0
    %454 = vmatpush1.msra.mxu0 0.0
    %455 = vmatprep.subr.mxu0 0.0
    %456 = vmatpush1.msra.mxu0 0.0
    %457 = vmatprep.subr.mxu0 0.0
    %458 = vmatpush1.msra.mxu0 0.0
    %459 = vmatprep.subr.mxu0 0.0
    %460 = vmatpush1.msra.mxu0 0.0
    %461 = vmatprep.subr.mxu0 0.0
    %462 = vmatpush1.msra.mxu0 0.0
    %463 = vmatprep.subr.mxu0 0.0
    %464 = vmatpush1.msra.mxu0 0.0
    %465 = vmatprep.subr.mxu0 0.0
    %466 = vmatpush1.msra.mxu0 0.0
    %467 = vmatprep.subr.mxu0 0.0
    %468 = vmatpush1.msra.mxu0 0.0
    %469 = vmatprep.subr.mxu0 0.0
    %470 = vmatpush1.msra.mxu0 0.0
    %471 = vmatprep.subr.mxu0 0.0
    %472 = vmatpush1.msra.mxu0 0.0
    %473 = vmatprep.subr.mxu0 0.0
    %474 = vmatpush1.msra.mxu0 0.0
    %475 = vmatprep.subr.mxu0 0.0
    %476 = vmatpush1.msra.mxu0 0.0
    %477 = vmatprep.subr.mxu0 0.0
    %478 = vmatpush1.msra.mxu0 0.0
    %479 = vmatprep.mubr.f32.mxu0 0.0
    %v480 = vand.u32 %v29, 4294901760
    %v481 = vsub.f32 %v29, %v480
    %v482 = vand.u32 %v481, 4294901760
    %483 = vmatmul.mubr.f32.gmra.mrb[0].mxu0 %v482
    %v484 = vpop.f32.mrb[0].mxu0
    %v485 = vadd.f32 %v396, %v484
    %v486 = vpop.f32.mrb[0].mxu0
    %487 = vdwg.mxu0
    %488 = vmatprep.subr.mxu0 0.0
    %v489 = vand.u32 %v30, 4294901760
    %v490 = vsub.f32 %v30, %v489
    %v491 = vand.u32 %v490, 4294901760
    %492 = vmatpush1.msra.mxu0 %v491
    %493 = vmatprep.subr.mxu0 0.0
    %v494 = vand.u32 %v31, 4294901760
    %v495 = vsub.f32 %v31, %v494
    %v496 = vand.u32 %v495, 4294901760
    %497 = vmatpush1.msra.mxu0 %v496
    %498 = vmatprep.subr.mxu0 0.0
    %v499 = vand.u32 %v32, 4294901760
    %v500 = vsub.f32 %v32, %v499
    %v501 = vand.u32 %v500, 4294901760
    %502 = vmatpush1.msra.mxu0 %v501
    %503 = vmatprep.subr.mxu0 0.0
    %v504 = vand.u32 %v33, 4294901760
    %v505 = vsub.f32 %v33, %v504
    %v506 = vand.u32 %v505, 4294901760
    %507 = vmatpush1.msra.mxu0 %v506
    %508 = vmatprep.subr.mxu0 0.0
    %v509 = vand.u32 %v34, 4294901760
    %v510 = vsub.f32 %v34, %v509
    %v511 = vand.u32 %v510, 4294901760
    %512 = vmatpush1.msra.mxu0 %v511
    %513 = vmatprep.subr.mxu0 0.0
    %v514 = vand.u32 %v35, 4294901760
    %v515 = vsub.f32 %v35, %v514
    %v516 = vand.u32 %v515, 4294901760
    %517 = vmatpush1.msra.mxu0 %v516
    %518 = vmatprep.subr.mxu0 0.0
    %v519 = vand.u32 %v36, 4294901760
    %v520 = vsub.f32 %v36, %v519
    %v521 = vand.u32 %v520, 4294901760
    %522 = vmatpush1.msra.mxu0 %v521
    %523 = vmatprep.subr.mxu0 0.0
    %v524 = vand.u32 %v37, 4294901760
    %v525 = vsub.f32 %v37, %v524
    %v526 = vand.u32 %v525, 4294901760
    %527 = vmatpush1.msra.mxu0 %v526
    %528 = vmatprep.subr.mxu0 0.0
    %v529 = vand.u32 %v38, 4294901760
    %v530 = vsub.f32 %v38, %v529
    %v531 = vand.u32 %v530, 4294901760
    %532 = vmatpush1.msra.mxu0 %v531
    %533 = vmatprep.subr.mxu0 0.0
    %v534 = vand.u32 %v39, 4294901760
    %v535 = vsub.f32 %v39, %v534
    %v536 = vand.u32 %v535, 4294901760
    %537 = vmatpush1.msra.mxu0 %v536
    %538 = vmatprep.subr.mxu0 0.0
    %v539 = vand.u32 %v40, 4294901760
    %v540 = vsub.f32 %v40, %v539
    %v541 = vand.u32 %v540, 4294901760
    %542 = vmatpush1.msra.mxu0 %v541
    %543 = vmatprep.subr.mxu0 0.0
    %v544 = vand.u32 %v41, 4294901760
    %v545 = vsub.f32 %v41, %v544
    %v546 = vand.u32 %v545, 4294901760
    %547 = vmatpush1.msra.mxu0 %v546
    %548 = vmatprep.subr.mxu0 0.0
    %v549 = vand.u32 %v42, 4294901760
    %v550 = vsub.f32 %v42, %v549
    %v551 = vand.u32 %v550, 4294901760
    %552 = vmatpush1.msra.mxu0 %v551
    %553 = vmatprep.subr.mxu0 0.0
    %v554 = vand.u32 %v43, 4294901760
    %v555 = vsub.f32 %v43, %v554
    %v556 = vand.u32 %v555, 4294901760
    %557 = vmatpush1.msra.mxu0 %v556
    %558 = vmatprep.subr.mxu0 0.0
    %v559 = vand.u32 %v44, 4294901760
    %v560 = vsub.f32 %v44, %v559
    %v561 = vand.u32 %v560, 4294901760
    %562 = vmatpush1.msra.mxu0 %v561
    %563 = vmatprep.subr.mxu0 0.0
    %v564 = vand.u32 %v45, 4294901760
    %v565 = vsub.f32 %v45, %v564
    %v566 = vand.u32 %v565, 4294901760
    %567 = vmatpush1.msra.mxu0 %v566
    %568 = vmatprep.subr.mxu0 0.0
    %569 = vmatpush1.msra.mxu0 0.0
    %570 = vmatprep.subr.mxu0 0.0
    %571 = vmatpush1.msra.mxu0 0.0
    %572 = vmatprep.subr.mxu0 0.0
    %573 = vmatpush1.msra.mxu0 0.0
    %574 = vmatprep.subr.mxu0 0.0
    %575 = vmatpush1.msra.mxu0 0.0
    %576 = vmatprep.subr.mxu0 0.0
    %577 = vmatpush1.msra.mxu0 0.0
    %578 = vmatprep.subr.mxu0 0.0
    %579 = vmatpush1.msra.mxu0 0.0
    %580 = vmatprep.subr.mxu0 0.0
    %581 = vmatpush1.msra.mxu0 0.0
    %582 = vmatprep.subr.mxu0 0.0
    %583 = vmatpush1.msra.mxu0 0.0
    %584 = vmatprep.subr.mxu0 0.0
    %585 = vmatpush1.msra.mxu0 0.0
    %586 = vmatprep.subr.mxu0 0.0
    %587 = vmatpush1.msra.mxu0 0.0
    %588 = vmatprep.subr.mxu0 0.0
    %589 = vmatpush1.msra.mxu0 0.0
    %590 = vmatprep.subr.mxu0 0.0
    %591 = vmatpush1.msra.mxu0 0.0
    %592 = vmatprep.subr.mxu0 0.0
    %593 = vmatpush1.msra.mxu0 0.0
    %594 = vmatprep.subr.mxu0 0.0
    %595 = vmatpush1.msra.mxu0 0.0
    %596 = vmatprep.subr.mxu0 0.0
    %597 = vmatpush1.msra.mxu0 0.0
    %598 = vmatprep.subr.mxu0 0.0
    %599 = vmatpush1.msra.mxu0 0.0
    %600 = vmatprep.mubr.f32.mxu0 0.0
    %v601 = vand.u32 %v29, 4294901760
    %602 = vmatmul.mubr.f32.gmra.mrb[0].mxu0 %v601
    %v603 = vpop.f32.mrb[0].mxu0
    %v604 = vadd.f32 %v485, %v603
    %v605 = vpop.f32.mrb[0].mxu0
    %606 = vdwg.mxu0
    %607 = vmatprep.subr.mxu0 0.0
    %v608 = vand.u32 %v30, 4294901760
    %609 = vmatpush1.msra.mxu0 %v608
    %610 = vmatprep.subr.mxu0 0.0
    %v611 = vand.u32 %v31, 4294901760
    %612 = vmatpush1.msra.mxu0 %v611
    %613 = vmatprep.subr.mxu0 0.0
    %v614 = vand.u32 %v32, 4294901760
    %615 = vmatpush1.msra.mxu0 %v614
    %616 = vmatprep.subr.mxu0 0.0
    %v617 = vand.u32 %v33, 4294901760
    %618 = vmatpush1.msra.mxu0 %v617
    %619 = vmatprep.subr.mxu0 0.0
    %v620 = vand.u32 %v34, 4294901760
    %621 = vmatpush1.msra.mxu0 %v620
    %622 = vmatprep.subr.mxu0 0.0
    %v623 = vand.u32 %v35, 4294901760
    %624 = vmatpush1.msra.mxu0 %v623
    %625 = vmatprep.subr.mxu0 0.0
    %v626 = vand.u32 %v36, 4294901760
    %627 = vmatpush1.msra.mxu0 %v626
    %628 = vmatprep.subr.mxu0 0.0
    %v629 = vand.u32 %v37, 4294901760
    %630 = vmatpush1.msra.mxu0 %v629
    %631 = vmatprep.subr.mxu0 0.0
    %v632 = vand.u32 %v38, 4294901760
    %633 = vmatpush1.msra.mxu0 %v632
    %634 = vmatprep.subr.mxu0 0.0
    %v635 = vand.u32 %v39, 4294901760
    %636 = vmatpush1.msra.mxu0 %v635
    %637 = vmatprep.subr.mxu0 0.0
    %v638 = vand.u32 %v40, 4294901760
    %639 = vmatpush1.msra.mxu0 %v638
    %640 = vmatprep.subr.mxu0 0.0
    %v641 = vand.u32 %v41, 4294901760
    %642 = vmatpush1.msra.mxu0 %v641
    %643 = vmatprep.subr.mxu0 0.0
    %v644 = vand.u32 %v42, 4294901760
    %645 = vmatpush1.msra.mxu0 %v644
    %646 = vmatprep.subr.mxu0 0.0
    %v647 = vand.u32 %v43, 4294901760
    %648 = vmatpush1.msra.mxu0 %v647
    %649 = vmatprep.subr.mxu0 0.0
    %v650 = vand.u32 %v44, 4294901760
    %651 = vmatpush1.msra.mxu0 %v650
    %652 = vmatprep.subr.mxu0 0.0
    %v653 = vand.u32 %v45, 4294901760
    %654 = vmatpush1.msra.mxu0 %v653
    %655 = vmatprep.subr.mxu0 0.0
    %656 = vmatpush1.msra.mxu0 0.0
    %657 = vmatprep.subr.mxu0 0.0
    %658 = vmatpush1.msra.mxu0 0.0
    %659 = vmatprep.subr.mxu0 0.0
    %660 = vmatpush1.msra.mxu0 0.0
    %661 = vmatprep.subr.mxu0 0.0
    %662 = vmatpush1.msra.mxu0 0.0
    %663 = vmatprep.subr.mxu0 0.0
    %664 = vmatpush1.msra.mxu0 0.0
    %665 = vmatprep.subr.mxu0 0.0
    %666 = vmatpush1.msra.mxu0 0.0
    %667 = vmatprep.subr.mxu0 0.0
    %668 = vmatpush1.msra.mxu0 0.0
    %669 = vmatprep.subr.mxu0 0.0
    %670 = vmatpush1.msra.mxu0 0.0
    %671 = vmatprep.subr.mxu0 0.0
    %672 = vmatpush1.msra.mxu0 0.0
    %673 = vmatprep.subr.mxu0 0.0
    %674 = vmatpush1.msra.mxu0 0.0
    %675 = vmatprep.subr.mxu0 0.0
    %676 = vmatpush1.msra.mxu0 0.0
    %677 = vmatprep.subr.mxu0 0.0
    %678 = vmatpush1.msra.mxu0 0.0
    %679 = vmatprep.subr.mxu0 0.0
    %680 = vmatpush1.msra.mxu0 0.0
    %681 = vmatprep.subr.mxu0 0.0
    %682 = vmatpush1.msra.mxu0 0.0
    %683 = vmatprep.subr.mxu0 0.0
    %684 = vmatpush1.msra.mxu0 0.0
    %685 = vmatprep.subr.mxu0 0.0
    %686 = vmatpush1.msra.mxu0 0.0
    %687 = vmatprep.mubr.f32.mxu0 0.0
    %v688 = vand.u32 %v29, 4294901760
    %689 = vmatmul.mubr.f32.gmra.mrb[0].mxu0 %v688
    %v690 = vpop.f32.mrb[0].mxu0
    %v691 = vadd.f32 %v604, %v690
    %v692 = vpop.f32.mrb[0].mxu0
    %693 = vdwg.mxu0
    %694 = vst [vmem:[#allocation5] sm:$0xff] %v691
    // Predicated region
    $region18: #{_apply_impl.1} parent=1 // pred_check
      _
    $region19: #{_apply_impl.1} parent=1 // pred_check_branch
      %696 = sbr.rel (0) target = $region21
    $region20: #{_apply_impl.1} parent=1 // pred_region
      %s698 = ssub.s32 128, 128
      %699 = vsyncadd [#allocation4], %s698
      %s701 = sshll.u32 [#allocation5], 4
      %s702 = int_to_ptr.vmem [resolvable:$true] %s701
      %704 = dma.vmem_to_hbm [thread:$0]  %s702, 128, %s3, [#allocation4]
    $region21: #{_apply_impl.1} parent=1 // pred_fallthru
      _
    // Predicated region
    $region22: #{_apply_impl.1} parent=1 // pred_check
      _
    $region23: #{_apply_impl.1} parent=1 // pred_check_branch
      %706 = sbr.rel (0) target = $region25
    $region24: #{_apply_impl.1} parent=1 // pred_region
      %707 = dma.done [#allocation4], 128
    $region25: #{_apply_impl.1} parent=1 // pred_fallthru
      _
    %708 = vsyncpa [#allocation3], 1
    %709 = vsyncpa [#allocation4], 1

</llo_original>
